<compile_context>
chip_gen: v7x
topology: tpu7x:2x2x1
jax: 0.10.0
libtpu: 0.0.40
codegen_flags: <defaults>
</compile_context>

<pallas_src>
import functools
import math

import jax
import jax.numpy as jnp
from jax.experimental import pallas as pl
from jax.experimental.pallas import tpu as pltpu


def _timestep_embedder_kernel(t_ref, w1_ref, b1_ref, w2_hbm_ref, b2_ref,
                              out_ref, w2_vmem, w2_sem, *,
                              half, neg_log_mp_over_half):
    # --- start the w2 weight DMA immediately; it overlaps with all layer-1 work.
    w2_copy = pltpu.make_async_copy(w2_hbm_ref, w2_vmem, w2_sem)
    w2_copy.start()

    # --- sinusoidal frequencies computed in-kernel: exp(-log(max_period) * k / half)
    k = jax.lax.broadcasted_iota(jnp.int32, (1, half), 1).astype(jnp.float32)
    freqs = jnp.exp(neg_log_mp_over_half * k)            # (1, half) f32, one EUP burst

    # --- args = t[:, None] * freqs  (single broadcast VPU mul, stays in vregs)
    args = t_ref[...] * freqs                            # (n, half) f32
    cos_e = jnp.cos(args)
    sin_e = jnp.sin(args)
    # NOTE: freq_dim is even (asserted in the wrapper), so the odd-dim zero-pad
    # branch of the reference implementation is a no-op and omitted.

    # --- Linear(freq_dim -> hidden) + SiLU
    # Both halves are lane-aligned 128-wide tiles, so the lane-axis concat is cheap
    # and the single K=freq_dim dot fully fills the MXU weight dimension (v6e/v7x).
    emb = jnp.concatenate([cos_e, sin_e], axis=-1).astype(jnp.bfloat16)   # (n, 2*half)
    h = jnp.dot(emb, w1_ref[...], preferred_element_type=jnp.float32)
    h = h + b1_ref[...]                                   # f32 bias
    h = h * jax.nn.sigmoid(h)                              # SiLU in f32

    # --- Linear(hidden -> hidden); w2 DMA has had the whole layer-1 to complete.
    w2_copy.wait()
    out_ref[...] = (
        jnp.dot(h.astype(jnp.bfloat16), w2_vmem[...], preferred_element_type=jnp.float32)
        + b2_ref[...]
    )


def timestep_embedder(t, w1, b1, w2, b2, *, frequency_embedding_size, max_period=10000):
    """TimestepEmbedder forward pass. t: (N,) -> (N, hidden).

    w1: (freq_dim, hidden) bf16, w2: (hidden, hidden) bf16 — cast once at setup
    time (outside the hot path), not per call.
    """
    n = t.shape[0]
    freq_dim = frequency_embedding_size
    assert freq_dim % 2 == 0, "frequency_embedding_size must be even"
    half = freq_dim // 2
    hidden = w1.shape[1]
    assert w1.shape == (freq_dim, hidden) and w2.shape == (hidden, hidden)
    # The whole-array VMEM layout assumes lane-aligned feature dims.
    assert half % 128 == 0 and hidden % 128 == 0, "half and hidden must be multiples of 128"
    # Weights must already be bf16 — do NOT cast per call (it would re-read the
    # f32 weights from HBM and defeat the point of the bf16 storage).
    assert w1.dtype == jnp.bfloat16 and w2.dtype == jnp.bfloat16, \
        "pass bf16 weights (cast once at parameter setup, not per call)"

    t2 = t.astype(jnp.float32).reshape(n, 1)
    b1r = b1.reshape(1, hidden).astype(jnp.float32)
    b2r = b2.reshape(1, hidden).astype(jnp.float32)

    kernel = functools.partial(
        _timestep_embedder_kernel,
        half=half, neg_log_mp_over_half=-math.log(max_period) / half)

    vmem = pl.BlockSpec(memory_space=pltpu.MemorySpace.VMEM)
    anyspace = pl.BlockSpec(memory_space=pl.ANY)   # w2 stays in HBM; DMA'd manually

    cost = pl.CostEstimate(
        flops=2 * n * freq_dim * hidden + 2 * n * hidden * hidden + 8 * n * hidden,
        transcendentals=2 * n * half + n * hidden + half,   # cos+sin, sigmoid, freqs exp
        bytes_accessed=(w1.size + w2.size) * 2               # bf16 weights
        + 2 * hidden * 4                                      # biases
        + n * 4                                               # t
        + n * hidden * 4,                                     # output
    )

    return pl.pallas_call(
        kernel,
        out_shape=jax.ShapeDtypeStruct((n, hidden), jnp.float32),
        in_specs=[vmem, vmem, vmem, anyspace, vmem],
        out_specs=vmem,
        scratch_shapes=[
            pltpu.VMEM((hidden, hidden), jnp.bfloat16),   # w2 landing buffer
            pltpu.SemaphoreType.DMA(()),                  # w2 DMA completion sem
        ],
        cost_estimate=cost,
    )(t2, w1, b1r, w2, b2r)


def _reference(t, w1, b1, w2, b2, frequency_embedding_size, max_period=10000):
    """Pure-JAX f32 reference mirroring the PyTorch module."""
    half = frequency_embedding_size // 2
    freqs = jnp.exp(-math.log(max_period) * jnp.arange(half, dtype=jnp.float32) / half)
    args = t.astype(jnp.float32)[:, None] * freqs[None]
    emb = jnp.concatenate([jnp.cos(args), jnp.sin(args)], axis=-1)
    h = emb @ w1 + b1
    h = h * jax.nn.sigmoid(h)
    return h @ w2 + b2


if __name__ == "__main__":
    # Small but module-consistent sizes (module defaults: hidden=512, freq=256).
    N = 8
    FREQ_DIM = 256
    HIDDEN = 256

    key = jax.random.PRNGKey(0)
    k_t, k_w1, k_b1, k_w2, k_b2 = jax.random.split(key, 5)

    t = jax.random.uniform(k_t, (N,), jnp.float32, minval=0.0, maxval=1000.0)

    # Deterministic synthetic parameters (stored as (in, out) for the kernel).
    w1 = jax.random.normal(k_w1, (FREQ_DIM, HIDDEN), jnp.float32) * 0.02
    b1 = jax.random.normal(k_b1, (HIDDEN,), jnp.float32) * 0.02
    w2 = jax.random.normal(k_w2, (HIDDEN, HIDDEN), jnp.float32) * 0.02
    b2 = jax.random.normal(k_b2, (HIDDEN,), jnp.float32) * 0.02

    # One-time bf16 weight cast at parameter setup (NOT in the per-call path).
    w1b = jax.block_until_ready(w1.astype(jnp.bfloat16))
    w2b = jax.block_until_ready(w2.astype(jnp.bfloat16))

    out = timestep_embedder(t, w1b, b1, w2b, b2, frequency_embedding_size=FREQ_DIM)
    out = jax.block_until_ready(out)

    ref = _reference(t, w1, b1, w2, b2, FREQ_DIM)
    assert out.shape == (N, HIDDEN)
    # Tolerance loosened vs the f32 reference because weights/activations feeding the
    # MXU are bf16 (f32 accumulation) — precision tradeoff, not a bug.
    assert jnp.allclose(out, ref, atol=1e-2, rtol=2e-2), "mismatch vs reference"

    print("KERNEL_OK")
</pallas_src>

<mosaic_0001>
module attributes {stable_mosaic.version = 11 : i64} {
  func.func @_timestep_embedder_kernel(%arg0: memref<8x1xf32, #tpu.memory_space<vmem>>, %arg1: memref<256x256xbf16, #tpu.memory_space<vmem>>, %arg2: memref<1x256xf32, #tpu.memory_space<vmem>>, %arg3: memref<256x256xbf16, #tpu.memory_space<any>>, %arg4: memref<1x256xf32, #tpu.memory_space<vmem>>, %arg5: memref<8x256xf32, #tpu.memory_space<vmem>>, %arg6: memref<256x256xbf16, #tpu.memory_space<vmem>>, %arg7: memref<!tpu.dma_semaphore, #tpu.memory_space<semaphore_mem>>) attributes {dimension_semantics = [], scalar_prefetch = 0 : i64, scratch_operands = 2 : i64, tpu.core_type = #tpu.core_type<tc>} {
    tpu.enqueue_dma source(%arg3 : memref<256x256xbf16, #tpu.memory_space<any>>) target(%arg6 : memref<256x256xbf16, #tpu.memory_space<vmem>>) target_semaphore(%arg7 : memref<!tpu.dma_semaphore, #tpu.memory_space<semaphore_mem>>)
    %0 = tpu.iota {dimensions = array<i32: 1>} : vector<1x128xi32>
    %1 = arith.sitofp %0 : vector<1x128xi32> to vector<1x128xf32>
    %cst = arith.constant -0.0719557852 : f32
    %2 = vector.broadcast %cst : f32 to vector<1x128xf32>
    %3 = arith.mulf %2, %1 : vector<1x128xf32>
    %4 = math.exp %3 : vector<1x128xf32>
    %c0 = arith.constant 0 : index
    %c0_0 = arith.constant 0 : index
    %5 = vector.load %arg0[%c0, %c0_0] : memref<8x1xf32, #tpu.memory_space<vmem>>, vector<8x1xf32>
    %6 = vector.broadcast %5 : vector<8x1xf32> to vector<8x128xf32>
    %7 = vector.broadcast %4 : vector<1x128xf32> to vector<8x128xf32>
    %8 = arith.mulf %6, %7 : vector<8x128xf32>
    %9 = math.cos %8 : vector<8x128xf32>
    %10 = math.sin %8 : vector<8x128xf32>
    %11 = tpu.concatenate %9, %10 in 1 : vector<8x128xf32>, vector<8x128xf32> -> vector<8x256xf32>
    %12 = arith.truncf %11 : vector<8x256xf32> to vector<8x256xbf16>
    %c0_1 = arith.constant 0 : index
    %c0_2 = arith.constant 0 : index
    %13 = vector.load %arg1[%c0_1, %c0_2] : memref<256x256xbf16, #tpu.memory_space<vmem>>, vector<256x256xbf16>
    %cst_3 = arith.constant dense<0.000000e+00> : vector<8x256xf32>
    %14 = tpu.matmul %12, %13, %cst_3 {dimension_numbers = #tpu.dot_dimension_numbers<[1], [0], [0], [1], [0, 0, 1, 1], [], []>} : vector<8x256xbf16>, vector<256x256xbf16>, vector<8x256xf32> -> vector<8x256xf32>
    %c0_4 = arith.constant 0 : index
    %c0_5 = arith.constant 0 : index
    %15 = vector.load %arg2[%c0_4, %c0_5] : memref<1x256xf32, #tpu.memory_space<vmem>>, vector<1x256xf32>
    %16 = vector.broadcast %15 : vector<1x256xf32> to vector<8x256xf32>
    %17 = arith.addf %14, %16 : vector<8x256xf32>
    %18 = arith.negf %17 : vector<8x256xf32>
    %19 = math.exp %18 : vector<8x256xf32>
    %cst_6 = arith.constant 1.000000e+00 : f32
    %20 = vector.broadcast %cst_6 : f32 to vector<8x256xf32>
    %21 = arith.addf %20, %19 : vector<8x256xf32>
    %22 = arith.divf %20, %21 : vector<8x256xf32>
    %23 = arith.mulf %17, %22 : vector<8x256xf32>
    tpu.wait_dma2 semaphore(%arg7 : memref<!tpu.dma_semaphore, #tpu.memory_space<semaphore_mem>>) src(%arg3 : memref<256x256xbf16, #tpu.memory_space<any>>) dst(%arg6 : memref<256x256xbf16, #tpu.memory_space<vmem>>)
    %24 = arith.truncf %23 : vector<8x256xf32> to vector<8x256xbf16>
    %c0_7 = arith.constant 0 : index
    %c0_8 = arith.constant 0 : index
    %25 = vector.load %arg6[%c0_7, %c0_8] : memref<256x256xbf16, #tpu.memory_space<vmem>>, vector<256x256xbf16>
    %cst_9 = arith.constant dense<0.000000e+00> : vector<8x256xf32>
    %26 = tpu.matmul %24, %25, %cst_9 {dimension_numbers = #tpu.dot_dimension_numbers<[1], [0], [0], [1], [0, 0, 1, 1], [], []>} : vector<8x256xbf16>, vector<256x256xbf16>, vector<8x256xf32> -> vector<8x256xf32>
    %c0_10 = arith.constant 0 : index
    %c0_11 = arith.constant 0 : index
    %27 = vector.load %arg4[%c0_10, %c0_11] : memref<1x256xf32, #tpu.memory_space<vmem>>, vector<1x256xf32>
    %28 = vector.broadcast %27 : vector<1x256xf32> to vector<8x256xf32>
    %29 = arith.addf %26, %28 : vector<8x256xf32>
    %c0_12 = arith.constant 0 : index
    %c0_13 = arith.constant 0 : index
    %30 = vector.load %arg5[%c0_12, %c0_13] : memref<8x256xf32, #tpu.memory_space<vmem>>, vector<8x256xf32>
    tpu.vector_store %arg5[%c0_12, %c0_13], %29 {strides = array<i32>} : memref<8x256xf32, #tpu.memory_space<vmem>>, vector<8x256xf32>,
    return
  }
}

</mosaic_0001>

<llo_original>
// kernel: tpu_custom_call.1
$region0: #{tpu_custom_call.1}
  #allocation0 [shape = 'u32[]', space=smem, size = 0x4, offset = 0x4, fixed_abs, tag = 'smem constant byte address 0x4 - core index']
  #allocation1 [shape = 'u32[144,128]{1,0:T(1,128)}', space=vmem, size = 0x12000, scoped, tag = 'internal scratch']
  #allocation2 [shape = 'bf16[256,256]{1,0:T(16,128)(2,1)}', space=vmem, size = 0x20000, scoped, tag = 'scratch operand']
  #allocation3 [shape = 's32[1]{0}', space=sflag, size = 0x4, scoped, tag = 'scratch operand']
  #allocation8 [shape = 's32[]', space=sflag, size = 0x4, offset = 0, fixed_abs, tag = 'sflag constant byte address 0x0 - dummy sync flag']
  %s0 = inlined_call_operand.vmem [shape: f32[8,1], index: 0, kind: input, shape index: {}]
  %s1 = inlined_call_operand.hbm [shape: bf16[256,256], index: 1, kind: input, shape index: {}]
  %s2 = inlined_call_operand.vmem [shape: f32[1,256], index: 2, kind: input, shape index: {}]
  %s3 = inlined_call_operand.hbm [shape: bf16[256,256], index: 3, kind: input, shape index: {}]
  %s4 = inlined_call_operand.vmem [shape: f32[1,256], index: 4, kind: input, shape index: {}]
  %s5 = inlined_call_operand.hbm [shape: f32[8,256], index: 5, kind: output, shape index: {}]
  %s6 = sld [smem:[#allocation0]]
  $region30: #{tpu_custom_call.1} parent=0
    _
  %s8 = ssub.s32 1, %s6
  %s9 = scalar_select 0, %s8, %s6
  $region1: #{tpu_custom_call.1} parent=0
    #allocation4 [shape = 'u8[131072]{0}', space=vmem, size = 0x20000, scoped, tag = 'input window, operand 1, single buffered']
    #allocation5 [shape = 's32[1]{0}', space=sflag, size = 0x4, scoped, tag = 'scoped memory for tpu_custom_call.1']
    #allocation6 [shape = 's32[1]{0}', space=sflag, size = 0x4, scoped, tag = 'scoped memory for tpu_custom_call.1']
    #allocation7 [shape = 'u8[8192]{0}', space=vmem, size = 0x2000, scoped, tag = 'output window, operand 0, single buffered']
    #allocation9 [shape = 'u32[9]{0}', space=smem, size = 0x24, scoped, tag = 'DMA stride descriptor']
    %10 = vsyncpa [#allocation5], 0
    %11 = vsyncpa [#allocation6], 0
    // Predicated region
    $region2: #{tpu_custom_call.1} parent=1 // pred_check
      _
    $region3: #{tpu_custom_call.1} parent=1 // pred_check_branch
      %13 = sbr.rel (0) target = $region5
    $region4: #{tpu_custom_call.1} parent=1 // pred_region
      _
    $region5: #{tpu_custom_call.1} parent=1 // pred_fallthru
      _
    // Predicated region
    $region6: #{tpu_custom_call.1} parent=1 // pred_check
      _
    $region7: #{tpu_custom_call.1} parent=1 // pred_check_branch
      %15 = sbr.rel (0) target = $region9
    $region8: #{tpu_custom_call.1} parent=1 // pred_region
      %s17 = ssub.s32 4096, 4096
      %18 = vsyncadd [#allocation5], %s17
      %s19 = sshll.u32 [#allocation4], 4
      %s20 = int_to_ptr.vmem [resolvable:$true] %s19
      %25 = dma.hbm_to_vmem [thread:$0]  %s1, 4096, %s20, [#allocation5], 128, 128, 8
    $region9: #{tpu_custom_call.1} parent=1 // pred_fallthru
      _
    // Predicated region
    $region10: #{tpu_custom_call.1} parent=1 // pred_check
      _
    $region11: #{tpu_custom_call.1} parent=1 // pred_check_branch
      %27 = sbr.rel (0) target = $region13
    $region12: #{tpu_custom_call.1} parent=1 // pred_region
      _
    $region13: #{tpu_custom_call.1} parent=1 // pred_fallthru
      _
    // Predicated region
    $region14: #{tpu_custom_call.1} parent=1 // pred_check
      _
    $region15: #{tpu_custom_call.1} parent=1 // pred_check_branch
      %29 = sbr.rel (0) target = $region17
    $region16: #{tpu_custom_call.1} parent=1 // pred_region
      _
    $region17: #{tpu_custom_call.1} parent=1 // pred_fallthru
      _
    // Predicated region
    $region18: #{tpu_custom_call.1} parent=1 // pred_check
      _
    $region19: #{tpu_custom_call.1} parent=1 // pred_check_branch
      %31 = sbr.rel (0) target = $region21
    $region20: #{tpu_custom_call.1} parent=1 // pred_region
      %32 = dma.done [#allocation5], 4096
    $region21: #{tpu_custom_call.1} parent=1 // pred_fallthru
      _
    %s34 = sshll.u32 1, 14
    %s35 = sxor.u32 4294967295, %s34
    %s37 = sld [smem:[#allocation0]]
    %s38 = sadd.s32 2, %s37
    %s40 = sshll.u32 7, 26
    %s41 = sxor.u32 4294967295, %s40
    %s42 = sand.u32 0, %s41
    %s43 = sshll.u32 %s38, 26
    %s44 = sor.u32 %s42, %s43
    %s45 = sshll.u32 [#allocation2], 4
    %s46 = int_to_ptr.vmem [resolvable:$true] %s45
    %49 = sst [smem:[#allocation9]] 256
    %s50 = scalar_lea.smem [#allocation9], 1
    %51 = sst [smem:[%s50]] 256
    %s52 = scalar_lea.smem [#allocation9], 2
    %53 = sst [smem:[%s52]] 2
    %s54 = scalar_lea.smem [#allocation9], 3
    %55 = sst [smem:[%s54]] 64
    %s56 = scalar_lea.smem [#allocation9], 4
    %57 = sst [smem:[%s56]] 128
    %s58 = scalar_lea.smem [#allocation9], 5
    %59 = sst [smem:[%s58]] 2
    %s60 = scalar_lea.smem [#allocation9], 6
    %61 = sst [smem:[%s60]] 128
    %s62 = scalar_lea.smem [#allocation9], 7
    %63 = sst [smem:[%s62]] 64
    %s64 = scalar_lea.smem [#allocation9], 8
    %65 = sst [smem:[%s64]] 4
    %67 = dma.general %s3, 4096, %s46, [#allocation3], [#allocation8], [#allocation9], %s44, 0
    %v68 = vlaneseq
    %v69 = vand.u32 %v68, 127
    %v70 = vcvt.s32.f32 %v69
    %v71 = vmul.f32 %v70, -0.071955785
    %v72 = vmul.f32 %v71, 1.442695
    %v73 = vpow.pop %v72
    %v74 = vld [vmem:[%s0] sm:$0xff]
    %76 = vset.pattern.permute.xlu0 0
    %77 = vperm.xlu0 %76, %v74
    %v78 = vpop.permute.xlu0 %77
    %v80 = vmul.f32 %v78, %v73
    %v81 = vand.u32 2147483647, %v80
    %vm82 = vcmp.le.f32.partialorder %v81, 0.7853982
    %vm83 = vcmp.lt.s32.totalorder %v80, 0
    %v84 = vand.u32 %v80, 2139095040
    %v85 = vshrl.u32 %v84, 23
    %v86 = vsub.s32 %v85, 127
    %v87 = vand.u32 2147483647, %v80
    %v88 = vand.u32 %v87, 8388607
    %v89 = vor.u32 %v88, 8388608
    %v90 = vsub.s32 0, %v89
    %v91 = vadd.s32 %v86, 1
    %vm92 = vcmp.gt.s32.totalorder %v91, 0
    %v93 = vsel %vm92, %v91, 0
    %v94 = vshrl.u32 %v93, 5
    %v95 = vand.u32 %v93, 31
    %v96 = vsub.s32 32, %v95
    %v97 = vshrl.u32 683565275, %v96
    %v98 = vshll.u32 683565275, %v95
    %v99 = vshrl.u32 2475754826, %v96
    %v100 = vor.u32 %v98, %v99
    %v101 = vshll.u32 2475754826, %v95
    %v102 = vshrl.u32 2131351028, %v96
    %v103 = vor.u32 %v101, %v102
    %v104 = vshll.u32 2131351028, %v95
    %v105 = vshrl.u32 2102212464, %v96
    %v106 = vor.u32 %v104, %v105
    %v107 = vshll.u32 2102212464, %v95
    %v108 = vshrl.u32 920167782, %v96
    %v109 = vor.u32 %v107, %v108
    %v110 = vshll.u32 920167782, %v95
    %v111 = vshrl.u32 1326507024, %v96
    %v112 = vor.u32 %v110, %v111
    %vm113 = vcmp.lt.s32.totalorder %v94, 1
    %vm114 = vcmp.lt.s32.totalorder %v94, 2
    %vm115 = vcmp.lt.s32.totalorder %v94, 3
    %vm116 = vcmp.lt.s32.totalorder %v94, 4
    %v117 = vsel %vm113, %v97, %v100
    %v118 = vsel %vm116, %v106, 2102212464
    %v119 = vsel %vm115, %v103, %v118
    %v120 = vsel %vm114, %v117, %v119
    %v121 = vsel %vm113, %v100, %v103
    %v122 = vsel %vm116, %v109, 920167782
    %v123 = vsel %vm115, %v106, %v122
    %v124 = vsel %vm114, %v121, %v123
    %v125 = vsel %vm113, %v103, %v106
    %v126 = vsel %vm116, %v112, 1326507024
    %v127 = vsel %vm115, %v109, %v126
    %v128 = vsel %vm114, %v125, %v127
    %v129 = vshll.u32 %v89, 8
    %v130 = vmul.u32.u64.compose %v129, %v128
    %v131 = vextract.low.u32 %v130
    %v132 = vextract.high.u32 %v130
    %v133 = vmul.u32.u64.compose %v129, %v124
    %v134 = vextract.low.u32 %v133
    %v135 = vextract.high.u32 %v133
    %v136 = vmul.u32 %v129, %v120
    %v137 = vadd.s32 %v132, %v134
    %vm138 = vc.u32 %v132, %v134
    %v139 = vadd.s32 %v135, 1
    %v140 = vsel %vm138, %v139, %v135
    %v141 = vadd.s32 %v136, %v140
    %v142 = vadd.s32 %v141, 536870912
    %v143 = vshrl.u32 %v142, 30
    %v144 = vshll.u32 %v143, 30
    %v145 = vsub.s32 %v141, %v144
    %vm146 = vcmp.lt.s32.totalorder %v145, 0
    %v147 = vsub.s32 0, %v145
    %v148 = vsel %vm146, %v147, %v145
    %v149 = vclz %v148
    %v150 = vsub.s32 %v149, 2
    %vm151 = vcmp.gt.s32.totalorder 0, %v150
    %v152 = vsel %vm151, 0, %v150
    %v153 = vsub.s32 32, %v152
    %v154 = vshll.u32 %v145, %v152
    %v155 = vshrl.u32 %v137, %v153
    %v156 = vor.u32 %v154, %v155
    %v157 = vsub.s32 4294967266, %v152
    %v158 = vadd.s32 %v157, 127
    %v159 = vshll.u32 %v158, 23
    %v160 = vor.u32 4788187, %v159
    %v161 = vand.u32 2147483647, %v160
    %v163 = vcvt.s32.f32 %v156
    %v164 = vmul.f32 %v163, %v161
    %v165 = vxor.u32 %v164, 2147483648
    %v166 = vsel %vm83, %v165, %v164
    %v167 = vsub.s32 4, %v143
    %v168 = vsel %vm83, %v167, %v143
    %v169 = vsel %vm82, %v80, %v166
    %v170 = vsel %vm82, 0, %v168
    %v171 = vcosq.f32.pop %v169
    %v172 = vsinq.f32.pop %v169
    %vm173 = vweird.f32 %v80
    %v174 = vand.u32 %v170, 3
    %vm175 = vcmp.lt.s32.totalorder %v174, 2
    %vm176 = vcmp.eq.s32.totalorder %v174, 0
    %v177 = vxor.u32 %v172, 2147483648
    %v178 = vsel %vm176, %v171, %v177
    %vm179 = vcmp.eq.s32.totalorder %v174, 2
    %v180 = vxor.u32 %v171, 2147483648
    %v181 = vsel %vm179, %v180, %v172
    %v182 = vsel %vm175, %v178, %v181
    %v183 = vsel %vm173, nan, %v182
    %v184 = vand.u32 2147483647, %v80
    %vm185 = vcmp.le.f32.partialorder %v184, 0.7853982
    %vm186 = vcmp.lt.s32.totalorder %v80, 0
    %v187 = vand.u32 %v80, 2139095040
    %v188 = vshrl.u32 %v187, 23
    %v189 = vsub.s32 %v188, 127
    %v190 = vand.u32 2147483647, %v80
    %v191 = vand.u32 %v190, 8388607
    %v192 = vor.u32 %v191, 8388608
    %v193 = vsub.s32 0, %v192
    %v194 = vadd.s32 %v189, 1
    %vm195 = vcmp.gt.s32.totalorder %v194, 0
    %v196 = vsel %vm195, %v194, 0
    %v197 = vshrl.u32 %v196, 5
    %v198 = vand.u32 %v196, 31
    %v199 = vsub.s32 32, %v198
    %v200 = vshrl.u32 683565275, %v199
    %v201 = vshll.u32 683565275, %v198
    %v202 = vshrl.u32 2475754826, %v199
    %v203 = vor.u32 %v201, %v202
    %v204 = vshll.u32 2475754826, %v198
    %v205 = vshrl.u32 2131351028, %v199
    %v206 = vor.u32 %v204, %v205
    %v207 = vshll.u32 2131351028, %v198
    %v208 = vshrl.u32 2102212464, %v199
    %v209 = vor.u32 %v207, %v208
    %v210 = vshll.u32 2102212464, %v198
    %v211 = vshrl.u32 920167782, %v199
    %v212 = vor.u32 %v210, %v211
    %v213 = vshll.u32 920167782, %v198
    %v214 = vshrl.u32 1326507024, %v199
    %v215 = vor.u32 %v213, %v214
    %vm216 = vcmp.lt.s32.totalorder %v197, 1
    %vm217 = vcmp.lt.s32.totalorder %v197, 2
    %vm218 = vcmp.lt.s32.totalorder %v197, 3
    %vm219 = vcmp.lt.s32.totalorder %v197, 4
    %v220 = vsel %vm216, %v200, %v203
    %v221 = vsel %vm219, %v209, 2102212464
    %v222 = vsel %vm218, %v206, %v221
    %v223 = vsel %vm217, %v220, %v222
    %v224 = vsel %vm216, %v203, %v206
    %v225 = vsel %vm219, %v212, 920167782
    %v226 = vsel %vm218, %v209, %v225
    %v227 = vsel %vm217, %v224, %v226
    %v228 = vsel %vm216, %v206, %v209
    %v229 = vsel %vm219, %v215, 1326507024
    %v230 = vsel %vm218, %v212, %v229
    %v231 = vsel %vm217, %v228, %v230
    %v232 = vshll.u32 %v192, 8
    %v233 = vmul.u32.u64.compose %v232, %v231
    %v234 = vextract.low.u32 %v233
    %v235 = vextract.high.u32 %v233
    %v236 = vmul.u32.u64.compose %v232, %v227
    %v237 = vextract.low.u32 %v236
    %v238 = vextract.high.u32 %v236
    %v239 = vmul.u32 %v232, %v223
    %v240 = vadd.s32 %v235, %v237
    %vm241 = vc.u32 %v235, %v237
    %v242 = vadd.s32 %v238, 1
    %v243 = vsel %vm241, %v242, %v238
    %v244 = vadd.s32 %v239, %v243
    %v245 = vadd.s32 %v244, 536870912
    %v246 = vshrl.u32 %v245, 30
    %v247 = vshll.u32 %v246, 30
    %v248 = vsub.s32 %v244, %v247
    %vm249 = vcmp.lt.s32.totalorder %v248, 0
    %v250 = vsub.s32 0, %v248
    %v251 = vsel %vm249, %v250, %v248
    %v252 = vclz %v251
    %v253 = vsub.s32 %v252, 2
    %vm254 = vcmp.gt.s32.totalorder 0, %v253
    %v255 = vsel %vm254, 0, %v253
    %v256 = vsub.s32 32, %v255
    %v257 = vshll.u32 %v248, %v255
    %v258 = vshrl.u32 %v240, %v256
    %v259 = vor.u32 %v257, %v258
    %v260 = vsub.s32 4294967266, %v255
    %v261 = vadd.s32 %v260, 127
    %v262 = vshll.u32 %v261, 23
    %v263 = vor.u32 4788187, %v262
    %v264 = vand.u32 2147483647, %v263
    %v266 = vcvt.s32.f32 %v259
    %v267 = vmul.f32 %v266, %v264
    %v268 = vxor.u32 %v267, 2147483648
    %v269 = vsel %vm186, %v268, %v267
    %v270 = vsub.s32 4, %v246
    %v271 = vsel %vm186, %v270, %v246
    %v272 = vsel %vm185, %v80, %v269
    %v273 = vsel %vm185, 0, %v271
    %v274 = vcosq.f32.pop %v272
    %v275 = vsinq.f32.pop %v272
    %vm276 = vweird.f32 %v80
    %v277 = vadd.s32 %v273, 3
    %v278 = vand.u32 %v277, 3
    %vm279 = vcmp.lt.s32.totalorder %v278, 2
    %vm280 = vcmp.eq.s32.totalorder %v278, 0
    %v281 = vxor.u32 %v275, 2147483648
    %v282 = vsel %vm280, %v274, %v281
    %vm283 = vcmp.eq.s32.totalorder %v278, 2
    %v284 = vxor.u32 %v274, 2147483648
    %v285 = vsel %vm283, %v284, %v275
    %v286 = vsel %vm279, %v282, %v285
    %v287 = vsel %vm276, nan, %v286
    %v288 = vpack.c.bf16 %v183, %v183
    %v289 = vpack.c.bf16 %v287, %v287
    %v290 = vld [vmem:[#allocation4] sm:$0xff]
    %v291 = vld [vmem:[#allocation4 + $0x8] sm:$0xff]
    %v292 = vld [vmem:[#allocation4 + $0x10] sm:$0xff]
    %v293 = vld [vmem:[#allocation4 + $0x18] sm:$0xff]
    %v294 = vld [vmem:[#allocation4 + $0x20] sm:$0xff]
    %v295 = vld [vmem:[#allocation4 + $0x28] sm:$0xff]
    %v296 = vld [vmem:[#allocation4 + $0x30] sm:$0xff]
    %v297 = vld [vmem:[#allocation4 + $0x38] sm:$0xff]
    %v298 = vld [vmem:[#allocation4 + $0x40] sm:$0xff]
    %v299 = vld [vmem:[#allocation4 + $0x48] sm:$0xff]
    %v300 = vld [vmem:[#allocation4 + $0x50] sm:$0xff]
    %v301 = vld [vmem:[#allocation4 + $0x58] sm:$0xff]
    %v302 = vld [vmem:[#allocation4 + $0x60] sm:$0xff]
    %v303 = vld [vmem:[#allocation4 + $0x68] sm:$0xff]
    %v304 = vld [vmem:[#allocation4 + $0x70] sm:$0xff]
    %v305 = vld [vmem:[#allocation4 + $0x78] sm:$0xff]
    %v306 = vld [vmem:[#allocation4 + $0x80] sm:$0xff]
    %v307 = vld [vmem:[#allocation4 + $0x88] sm:$0xff]
    %v308 = vld [vmem:[#allocation4 + $0x90] sm:$0xff]
    %v309 = vld [vmem:[#allocation4 + $0x98] sm:$0xff]
    %v310 = vld [vmem:[#allocation4 + $0xa0] sm:$0xff]
    %v311 = vld [vmem:[#allocation4 + $0xa8] sm:$0xff]
    %v312 = vld [vmem:[#allocation4 + $0xb0] sm:$0xff]
    %v313 = vld [vmem:[#allocation4 + $0xb8] sm:$0xff]
    %v314 = vld [vmem:[#allocation4 + $0xc0] sm:$0xff]
    %v315 = vld [vmem:[#allocation4 + $0xc8] sm:$0xff]
    %v316 = vld [vmem:[#allocation4 + $0xd0] sm:$0xff]
    %v317 = vld [vmem:[#allocation4 + $0xd8] sm:$0xff]
    %v318 = vld [vmem:[#allocation4 + $0xe0] sm:$0xff]
    %v319 = vld [vmem:[#allocation4 + $0xe8] sm:$0xff]
    %v320 = vld [vmem:[#allocation4 + $0xf0] sm:$0xff]
    %v321 = vld [vmem:[#allocation4 + $0xf8] sm:$0xff]
    %v322 = vld [vmem:[%s2] sm:$0x3]
    %v324 = vlaneseq
    %v325 = vshrl.u32 %v324, 7
    %v326 = vsub.s32 0, %v325
    %v327 = vrot.slane %v322, %v326
    %v328 = vlaneseq
    %v329 = vshrl.u32 %v328, 7
    %v330 = vsub.s32 1, %v329
    %v331 = vrot.slane %v322, %v330
    %v366 = vunpack.c.l.b16 %v290
    %v367 = vunpack.c.h.b16 %v290
    %v368 = vunpack.c.l.b16 %v291
    %v369 = vunpack.c.h.b16 %v291
    %v370 = vunpack.c.l.b16 %v292
    %v371 = vunpack.c.h.b16 %v292
    %v372 = vunpack.c.l.b16 %v293
    %v373 = vunpack.c.h.b16 %v293
    %v374 = vunpack.c.l.b16 %v294
    %v375 = vunpack.c.h.b16 %v294
    %v376 = vunpack.c.l.b16 %v295
    %v377 = vunpack.c.h.b16 %v295
    %v378 = vunpack.c.l.b16 %v296
    %v379 = vunpack.c.h.b16 %v296
    %v380 = vunpack.c.l.b16 %v297
    %v381 = vunpack.c.h.b16 %v297
    %v382 = vunpack.c.l.b16 %v298
    %v383 = vunpack.c.h.b16 %v298
    %v384 = vunpack.c.l.b16 %v299
    %v385 = vunpack.c.h.b16 %v299
    %v386 = vunpack.c.l.b16 %v300
    %v387 = vunpack.c.h.b16 %v300
    %v388 = vunpack.c.l.b16 %v301
    %v389 = vunpack.c.h.b16 %v301
    %v390 = vunpack.c.l.b16 %v302
    %v391 = vunpack.c.h.b16 %v302
    %v392 = vunpack.c.l.b16 %v303
    %v393 = vunpack.c.h.b16 %v303
    %v394 = vunpack.c.l.b16 %v304
    %v395 = vunpack.c.h.b16 %v304
    %v396 = vunpack.c.l.b16 %v305
    %v397 = vunpack.c.h.b16 %v305
    %v398 = vunpack.c.l.b16 %v306
    %v399 = vunpack.c.h.b16 %v306
    %v400 = vunpack.c.l.b16 %v307
    %v401 = vunpack.c.h.b16 %v307
    %v402 = vunpack.c.l.b16 %v308
    %v403 = vunpack.c.h.b16 %v308
    %v404 = vunpack.c.l.b16 %v309
    %v405 = vunpack.c.h.b16 %v309
    %v406 = vunpack.c.l.b16 %v310
    %v407 = vunpack.c.h.b16 %v310
    %v408 = vunpack.c.l.b16 %v311
    %v409 = vunpack.c.h.b16 %v311
    %v410 = vunpack.c.l.b16 %v312
    %v411 = vunpack.c.h.b16 %v312
    %v412 = vunpack.c.l.b16 %v313
    %v413 = vunpack.c.h.b16 %v313
    %v414 = vunpack.c.l.b16 %v314
    %v415 = vunpack.c.h.b16 %v314
    %v416 = vunpack.c.l.b16 %v315
    %v417 = vunpack.c.h.b16 %v315
    %v418 = vunpack.c.l.b16 %v316
    %v419 = vunpack.c.h.b16 %v316
    %v420 = vunpack.c.l.b16 %v317
    %v421 = vunpack.c.h.b16 %v317
    %v422 = vunpack.c.l.b16 %v318
    %v423 = vunpack.c.h.b16 %v318
    %v424 = vunpack.c.l.b16 %v319
    %v425 = vunpack.c.h.b16 %v319
    %v426 = vunpack.c.l.b16 %v320
    %v427 = vunpack.c.h.b16 %v320
    %v428 = vunpack.c.l.b16 %v321
    %v429 = vunpack.c.h.b16 %v321
    %v430 = vpack.c.b16 %v368, %v366
    %v431 = vpack.c.b16 %v369, %v367
    %v432 = vpack.c.b16 %v372, %v370
    %v433 = vpack.c.b16 %v373, %v371
    %v434 = vpack.c.b16 %v376, %v374
    %v435 = vpack.c.b16 %v377, %v375
    %v436 = vpack.c.b16 %v380, %v378
    %v437 = vpack.c.b16 %v381, %v379
    %v438 = vpack.c.b16 %v384, %v382
    %v439 = vpack.c.b16 %v385, %v383
    %v440 = vpack.c.b16 %v388, %v386
    %v441 = vpack.c.b16 %v389, %v387
    %v442 = vpack.c.b16 %v392, %v390
    %v443 = vpack.c.b16 %v393, %v391
    %v444 = vpack.c.b16 %v396, %v394
    %v445 = vpack.c.b16 %v397, %v395
    %v446 = vpack.c.b16 %v400, %v398
    %v447 = vpack.c.b16 %v401, %v399
    %v448 = vpack.c.b16 %v404, %v402
    %v449 = vpack.c.b16 %v405, %v403
    %v450 = vpack.c.b16 %v408, %v406
    %v451 = vpack.c.b16 %v409, %v407
    %v452 = vpack.c.b16 %v412, %v410
    %v453 = vpack.c.b16 %v413, %v411
    %v454 = vpack.c.b16 %v416, %v414
    %v455 = vpack.c.b16 %v417, %v415
    %v456 = vpack.c.b16 %v420, %v418
    %v457 = vpack.c.b16 %v421, %v419
    %v458 = vpack.c.b16 %v424, %v422
    %v459 = vpack.c.b16 %v425, %v423
    %v460 = vpack.c.b16 %v428, %v426
    %v461 = vpack.c.b16 %v429, %v427
    %494 = vmatprep.subr.bf16.mxu0 %v431
    %495 = vmatpush1.bf16.msra.mxu0 %v430
    %496 = vmatprep.subr.bf16.mxu0 %v433
    %497 = vmatpush1.bf16.msra.mxu0 %v432
    %498 = vmatprep.subr.bf16.mxu0 %v435
    %499 = vmatpush1.bf16.msra.mxu0 %v434
    %500 = vmatprep.subr.bf16.mxu0 %v437
    %501 = vmatpush1.bf16.msra.mxu0 %v436
    %502 = vmatprep.subr.bf16.mxu0 %v439
    %503 = vmatpush1.bf16.msra.mxu0 %v438
    %504 = vmatprep.subr.bf16.mxu0 %v441
    %505 = vmatpush1.bf16.msra.mxu0 %v440
    %506 = vmatprep.subr.bf16.mxu0 %v443
    %507 = vmatpush1.bf16.msra.mxu0 %v442
    %508 = vmatprep.subr.bf16.mxu0 %v445
    %509 = vmatpush1.bf16.msra.mxu0 %v444
    %510 = vmatprep.subr.bf16.mxu0 %v447
    %511 = vmatpush1.bf16.msra.mxu0 %v446
    %512 = vmatprep.subr.bf16.mxu0 %v449
    %513 = vmatpush1.bf16.msra.mxu0 %v448
    %514 = vmatprep.subr.bf16.mxu0 %v451
    %515 = vmatpush1.bf16.msra.mxu0 %v450
    %516 = vmatprep.subr.bf16.mxu0 %v453
    %517 = vmatpush1.bf16.msra.mxu0 %v452
    %518 = vmatprep.subr.bf16.mxu0 %v455
    %519 = vmatpush1.bf16.msra.mxu0 %v454
    %520 = vmatprep.subr.bf16.mxu0 %v457
    %521 = vmatpush1.bf16.msra.mxu0 %v456
    %522 = vmatprep.subr.bf16.mxu0 %v459
    %523 = vmatpush1.bf16.msra.mxu0 %v458
    %524 = vmatprep.subr.bf16.mxu0 %v461
    %525 = vmatpush1.bf16.msra.mxu0 %v460
    %526 = vmatprep.mubr.bf16.mxu0 %v289
    %527 = vmatmul.mubr.bf16.gmra.mrb[0].mxu0 %v288
    %v528 = vpop.f32.mrb[0].mxu0
    %v529 = vadd.f32 %v327, %v528
    %v530 = vpop.f32.mrb[0].mxu0
    %v531 = vadd.f32 %v331, %v530
    %v532 = vpop.f32.mrb[0].mxu0
    %v533 = vpop.f32.mrb[0].mxu0
    %534 = vdwg.mxu0
    %v535 = vxor.u32 %v529, 2147483648
    %v536 = vxor.u32 %v531, 2147483648
    %v537 = vmul.f32 %v535, 1.442695
    %v538 = vpow.pop %v537
    %v539 = vmul.f32 %v536, 1.442695
    %v540 = vpow.pop %v539
    %v541 = vadd.f32 %v538, 1.0
    %v542 = vadd.f32 %v540, 1.0
    %v543 = vrcp.pop %v541
    %v544 = vmul.f32 1.0, %v543
    %v545 = vrcp.pop %v542
    %v546 = vmul.f32 1.0, %v545
    %v547 = vmul.f32 %v529, %v544
    %v548 = vmul.f32 %v531, %v546
    %s549 = smul.u32 4, 32
    %s550 = smul.u32 %s549, 2
    %s551 = sshll.u32 %s550, 4
    %552 = dma.done [#allocation3], %s551
    %v553 = vpack.c.bf16 %v547, %v547
    %v554 = vpack.c.bf16 %v548, %v548
    %v555 = vld [vmem:[#allocation2] sm:$0xff]
    %v556 = vld [vmem:[#allocation2 + $0x8] sm:$0xff]
    %v557 = vld [vmem:[#allocation2 + $0x10] sm:$0xff]
    %v558 = vld [vmem:[#allocation2 + $0x18] sm:$0xff]
    %v559 = vld [vmem:[#allocation2 + $0x20] sm:$0xff]
    %v560 = vld [vmem:[#allocation2 + $0x28] sm:$0xff]
    %v561 = vld [vmem:[#allocation2 + $0x30] sm:$0xff]
    %v562 = vld [vmem:[#allocation2 + $0x38] sm:$0xff]
    %v563 = vld [vmem:[#allocation2 + $0x40] sm:$0xff]
    %v564 = vld [vmem:[#allocation2 + $0x48] sm:$0xff]
    %v565 = vld [vmem:[#allocation2 + $0x50] sm:$0xff]
    %v566 = vld [vmem:[#allocation2 + $0x58] sm:$0xff]
    %v567 = vld [vmem:[#allocation2 + $0x60] sm:$0xff]
    %v568 = vld [vmem:[#allocation2 + $0x68] sm:$0xff]
    %v569 = vld [vmem:[#allocation2 + $0x70] sm:$0xff]
    %v570 = vld [vmem:[#allocation2 + $0x78] sm:$0xff]
    %v571 = vld [vmem:[#allocation2 + $0x80] sm:$0xff]
    %v572 = vld [vmem:[#allocation2 + $0x88] sm:$0xff]
    %v573 = vld [vmem:[#allocation2 + $0x90] sm:$0xff]
    %v574 = vld [vmem:[#allocation2 + $0x98] sm:$0xff]
    %v575 = vld [vmem:[#allocation2 + $0xa0] sm:$0xff]
    %v576 = vld [vmem:[#allocation2 + $0xa8] sm:$0xff]
    %v577 = vld [vmem:[#allocation2 + $0xb0] sm:$0xff]
    %v578 = vld [vmem:[#allocation2 + $0xb8] sm:$0xff]
    %v579 = vld [vmem:[#allocation2 + $0xc0] sm:$0xff]
    %v580 = vld [vmem:[#allocation2 + $0xc8] sm:$0xff]
    %v581 = vld [vmem:[#allocation2 + $0xd0] sm:$0xff]
    %v582 = vld [vmem:[#allocation2 + $0xd8] sm:$0xff]
    %v583 = vld [vmem:[#allocation2 + $0xe0] sm:$0xff]
    %v584 = vld [vmem:[#allocation2 + $0xe8] sm:$0xff]
    %v585 = vld [vmem:[#allocation2 + $0xf0] sm:$0xff]
    %v586 = vld [vmem:[#allocation2 + $0xf8] sm:$0xff]
    %v587 = vld [vmem:[%s4] sm:$0x3]
    %v589 = vlaneseq
    %v590 = vshrl.u32 %v589, 7
    %v591 = vsub.s32 0, %v590
    %v592 = vrot.slane %v587, %v591
    %v593 = vlaneseq
    %v594 = vshrl.u32 %v593, 7
    %v595 = vsub.s32 1, %v594
    %v596 = vrot.slane %v587, %v595
    %599 = vmatprep.subr.bf16.mxu0 %v556
    %600 = vmatpush1.bf16.msra.mxu0 %v555
    %601 = vmatprep.subr.bf16.mxu0 %v558
    %602 = vmatpush1.bf16.msra.mxu0 %v557
    %603 = vmatprep.subr.bf16.mxu0 %v560
    %604 = vmatpush1.bf16.msra.mxu0 %v559
    %605 = vmatprep.subr.bf16.mxu0 %v562
    %606 = vmatpush1.bf16.msra.mxu0 %v561
    %607 = vmatprep.subr.bf16.mxu0 %v564
    %608 = vmatpush1.bf16.msra.mxu0 %v563
    %609 = vmatprep.subr.bf16.mxu0 %v566
    %610 = vmatpush1.bf16.msra.mxu0 %v565
    %611 = vmatprep.subr.bf16.mxu0 %v568
    %612 = vmatpush1.bf16.msra.mxu0 %v567
    %613 = vmatprep.subr.bf16.mxu0 %v570
    %614 = vmatpush1.bf16.msra.mxu0 %v569
    %615 = vmatprep.subr.bf16.mxu0 %v572
    %616 = vmatpush1.bf16.msra.mxu0 %v571
    %617 = vmatprep.subr.bf16.mxu0 %v574
    %618 = vmatpush1.bf16.msra.mxu0 %v573
    %619 = vmatprep.subr.bf16.mxu0 %v576
    %620 = vmatpush1.bf16.msra.mxu0 %v575
    %621 = vmatprep.subr.bf16.mxu0 %v578
    %622 = vmatpush1.bf16.msra.mxu0 %v577
    %623 = vmatprep.subr.bf16.mxu0 %v580
    %624 = vmatpush1.bf16.msra.mxu0 %v579
    %625 = vmatprep.subr.bf16.mxu0 %v582
    %626 = vmatpush1.bf16.msra.mxu0 %v581
    %627 = vmatprep.subr.bf16.mxu0 %v584
    %628 = vmatpush1.bf16.msra.mxu0 %v583
    %629 = vmatprep.subr.bf16.mxu0 %v586
    %630 = vmatpush1.bf16.msra.mxu0 %v585
    %631 = vmatprep.mubr.bf16.mxu0 %v554
    %632 = vmatmul.mubr.bf16.gmra.mrb[0].mxu0 %v553
    %v633 = vpop.f32.mrb[0].mxu0
    %v634 = vadd.f32 %v592, %v633
    %v635 = vpop.f32.mrb[0].mxu0
    %v636 = vadd.f32 %v596, %v635
    %v637 = vpop.f32.mrb[0].mxu0
    %v638 = vpop.f32.mrb[0].mxu0
    %639 = vdwg.mxu0
    %640 = vst [vmem:[#allocation7] sm:$0xff] %v634
    %641 = vst [vmem:[#allocation7 + $0x8] sm:$0xff] %v636
    // Predicated region
    $region22: #{tpu_custom_call.1} parent=1 // pred_check
      _
    $region23: #{tpu_custom_call.1} parent=1 // pred_check_branch
      %643 = sbr.rel (0) target = $region25
    $region24: #{tpu_custom_call.1} parent=1 // pred_region
      %s645 = ssub.s32 256, 256
      %646 = vsyncadd [#allocation6], %s645
      %s648 = sshll.u32 [#allocation7], 4
      %s649 = int_to_ptr.vmem [resolvable:$true] %s648
      %651 = dma.vmem_to_hbm [thread:$0]  %s649, 256, %s5, [#allocation6]
    $region25: #{tpu_custom_call.1} parent=1 // pred_fallthru
      _
    // Predicated region
    $region26: #{tpu_custom_call.1} parent=1 // pred_check
      _
    $region27: #{tpu_custom_call.1} parent=1 // pred_check_branch
      %653 = sbr.rel (0) target = $region29
    $region28: #{tpu_custom_call.1} parent=1 // pred_region
      %654 = dma.done [#allocation6], 256
    $region29: #{tpu_custom_call.1} parent=1 // pred_fallthru
      _
    %655 = vsyncpa [#allocation5], 1
    %656 = vsyncpa [#allocation6], 1
  %657 = vsyncmov [#allocation3]
  %s658 = vpop.sfrf %657
  %p659 = scmp.eq.s32.totalorder %s658, 0
  %p660 = pneg %p659
  %662 = shalt.err (%p660)

</llo_original>
